<compile_context>
chip_gen: v6e
topology: v6e:2x2x1
jax: 0.10.0
libtpu: 0.0.40
codegen_flags: <defaults>
</compile_context>

<pallas_src>
import math

import jax
import jax.numpy as jnp
import numpy as np
from jax.experimental import pallas as pl
from jax.experimental.pallas import tpu as pltpu


def _round_up(a, b):
    return (a + b - 1) // b * b


def _spmm_kernel(dinv_ref, adj_ref, xw_ref, bias_ref, o_ref, acc_ref):
    """out[b, t] = dinv_rows * (sum_k adj[b, t, k] @ xw[b, k]) + bias.

    dinv_ref : (1, TM, 1)   f32   deg^{-1/2} rows of this tile
    adj_ref  : (1, TM, TK)        adjacency tile (bf16 or f32 storage)
    xw_ref   : (1, TK, Cp)        Y = dinv * (X @ W) contraction block
    bias_ref : (1, Cp)
    o_ref    : (1, TM, Cp)
    acc_ref  : (TM, Cp) f32 scratch accumulator (persists across k)
    """
    k = pl.program_id(2)

    @pl.when(k == 0)
    def _():
        acc_ref[...] = jnp.zeros_like(acc_ref)

    a = adj_ref[0].astype(xw_ref.dtype)      # no-op when dtypes already match
    acc_ref[...] += jnp.dot(a, xw_ref[0], preferred_element_type=jnp.float32)

    @pl.when(k == pl.num_programs(2) - 1)
    def _():
        out = dinv_ref[0] * acc_ref[...] + bias_ref[...].astype(jnp.float32)
        o_ref[0] = out.astype(o_ref.dtype)


def node_network_dense(x, adj, weight, bias=None, mask=None, add_loop=True,
                       improved=False, compute_dtype=None, adj_bf16=None,
                       tm_max=256, tk_max=512, max_concat_cols=2048):
    """JAX/Pallas equivalent of NodeNetwork_dense.forward.

    compute_dtype: dtype of the MXU operands (default: result_type(x, weight)).
                   Pass jnp.bfloat16 explicitly to trade precision for speed.
    adj_bf16:      stream the adjacency as bf16 (lossless for {0,1} adjacency).
                   Default: only when the compute dtype is already bf16.
    """
    if x.ndim == 2:
        x = x[None]
    if adj.ndim == 2:
        adj = adj[None]

    B, N, F = x.shape
    B_adj = adj.shape[0]
    assert adj.shape[1:] == (N, N)
    assert B_adj in (1, B), "adjacency batch must be 1 (shared) or B"
    C = weight.shape[-1]
    loop_val = 2.0 if improved else 1.0

    out_dtype = jnp.result_type(x.dtype, weight.dtype)
    compute_dtype = jnp.dtype(out_dtype if compute_dtype is None else compute_dtype)
    if adj_bf16 is None:
        adj_bf16 = (compute_dtype == jnp.bfloat16) or (adj.dtype == jnp.bfloat16)

    # ---- degree / self-loop stats: ONE rowsum pass over adj (no f32 copy) ----
    deg = jnp.sum(adj, axis=-1, dtype=jnp.float32)                # (B_adj, N)
    if add_loop:
        diag = jnp.diagonal(adj, axis1=-2, axis2=-1).astype(jnp.float32)
        deg = deg - diag + jnp.float32(loop_val)                  # diag is *set*
    dinv = jnp.maximum(deg, 1.0) ** -0.5                          # (B_adj, N)

    # ---- pad out_channels to lane width (lane-dense stores, full MXU cols) ---
    LANE = 128
    Cp = _round_up(C, LANE)
    w_p = jnp.pad(weight, ((0, 0), (0, Cp - C))) if Cp != C else weight
    if bias is None:
        bias_p = jnp.zeros((1, Cp), dtype=out_dtype)
    else:
        bias_p = jnp.reshape(bias, (1, C))
        if Cp != C:
            bias_p = jnp.pad(bias_p, ((0, 0), (0, Cp - C)))

    # ---- Y = dinv ⊙ (X @ W): tiny O(N*F*C) matmul, plain JAX (per review) ----
    xw = jnp.einsum('bnf,fc->bnc', x, w_p,
                    preferred_element_type=jnp.float32,
                    precision=jax.lax.Precision.HIGHEST)          # (B, N, Cp) f32
    xw = dinv[..., None] * xw                                     # B_adj -> B bcast
    xw = xw.astype(compute_dtype)

    # adjacency storage dtype fed to the kernel
    adj_k = adj.astype(jnp.bfloat16) if (adj_bf16 and adj.dtype != jnp.bfloat16) else adj

    # ---- tile geometry -------------------------------------------------------
    if N <= tm_max:
        TM, NPr = N, N
    else:
        TM, NPr = tm_max, _round_up(N, tm_max)
    if N <= tk_max:
        TK, NPc = N, N
    else:
        TK, NPc = tk_max, _round_up(N, tk_max)

    # ---- shared adjacency: fold batch into channels so the N^2 matrix is
    #      streamed once and the MXU sees a wide (TK, B*Cp) RHS ----------------
    concat = (B_adj == 1) and (B > 1) and (B * Cp <= max_concat_cols)
    if concat:
        xw_in = jnp.transpose(xw, (1, 0, 2)).reshape(1, N, B * Cp)
        bias_in = jnp.tile(bias_p, (1, B))
        Beff, Ceff = 1, B * Cp
    else:
        xw_in, bias_in = xw, bias_p
        Beff, Ceff = B, Cp

    # ---- padding of the node dims (only when tiling requires it) -------------
    if NPr != N or NPc != N:
        adj_k = jnp.pad(adj_k, ((0, 0), (0, NPr - N), (0, NPc - N)))
    if NPc != N:
        xw_in = jnp.pad(xw_in, ((0, 0), (0, NPc - N), (0, 0)))
    dinv_in = dinv[..., None]                                     # (B_adj, N, 1)
    if NPr != N:
        dinv_in = jnp.pad(dinv_in, ((0, 0), (0, NPr - N), (0, 0)))

    if (B_adj == B) and (not concat):
        adj_map = lambda b, t, k: (b, t, k)
        dinv_map = lambda b, t, k: (b, t, 0)
    else:
        adj_map = lambda b, t, k: (0, t, k)
        dinv_map = lambda b, t, k: (0, t, 0)

    T, K = NPr // TM, NPc // TK
    grid = (Beff, T, K)

    in_specs = [
        pl.BlockSpec((1, TM, 1), dinv_map),                       # dinv rows
        pl.BlockSpec((1, TM, TK), adj_map),                       # adjacency tile
        pl.BlockSpec((1, TK, Ceff), lambda b, t, k: (b, k, 0)),   # Y contraction blk
        pl.BlockSpec((1, Ceff), lambda b, t, k: (0, 0)),          # bias
    ]
    out_spec = pl.BlockSpec((1, TM, Ceff), lambda b, t, k: (b, t, 0))

    cost = pl.CostEstimate(
        flops=int(2 * Beff * NPr * NPc * Ceff),
        transcendentals=0,
        bytes_accessed=int(adj_k.size * adj_k.dtype.itemsize
                           + xw_in.size * xw_in.dtype.itemsize
                           + Beff * NPr * Ceff * jnp.dtype(out_dtype).itemsize))

    out = pl.pallas_call(
        _spmm_kernel,
        out_shape=jax.ShapeDtypeStruct((Beff, NPr, Ceff), out_dtype),
        grid_spec=pltpu.PrefetchScalarGridSpec(
            num_scalar_prefetch=0,
            grid=grid,
            in_specs=in_specs,
            out_specs=out_spec,
            scratch_shapes=[pltpu.VMEM((TM, Ceff), jnp.float32)],
        ),
        compiler_params=pltpu.CompilerParams(
            dimension_semantics=("parallel", "parallel", "arbitrary"),
            vmem_limit_bytes=48 * 1024 * 1024),
        cost_estimate=cost,
    )(dinv_in, adj_k, xw_in, bias_in)

    # ---- epilogue (XLA fuses: un-concat, slice, self-loop correction, mask) --
    if concat:
        out = jnp.transpose(out.reshape(NPr, B, Cp), (1, 0, 2))   # (B, NPr, Cp)
    out = out[:, :N, :C]

    if add_loop:
        # rank-1 additive self-loop correction: out_r += dinv_r*(loop_val-diag_r)*Y_r
        corr = (dinv * (jnp.float32(loop_val) - diag))[..., None]  # (B_adj, N, 1)
        out = out + corr * xw[:, :, :C].astype(jnp.float32)
    if mask is not None:
        out = out * jnp.reshape(mask, (B, N, 1)).astype(jnp.float32)
    return out.astype(out_dtype)


def _reference(x, adj, weight, bias, mask=None, add_loop=True, improved=False):
    """Plain-JAX reference mirroring the torch forward (f32 path)."""
    if x.ndim == 2:
        x = x[None]
    if adj.ndim == 2:
        adj = adj[None]
    B, N, _ = x.shape
    if add_loop:
        eye = jnp.eye(N, dtype=adj.dtype)
        loop_val = 2.0 if improved else 1.0
        adj = adj * (1.0 - eye) + eye * loop_val
    out = jnp.matmul(x, weight, precision=jax.lax.Precision.HIGHEST)
    deg_inv_sqrt = jnp.maximum(adj.sum(-1), 1.0) ** -0.5
    adj = deg_inv_sqrt[..., :, None] * adj * deg_inv_sqrt[..., None, :]
    out = jnp.matmul(adj, out, precision=jax.lax.Precision.HIGHEST)
    if bias is not None:
        out = out + bias
    if mask is not None:
        out = out * mask.reshape(B, N, 1).astype(x.dtype)
    return out


if __name__ == "__main__":
    key = jax.random.PRNGKey(0)
    kx, ka, kw, kb, km, ka2, kx2 = jax.random.split(key, 7)

    # shapes consistent with the module: B graphs, N nodes, F in-feats, C out-feats
    B, N, F, C = 2, 8, 16, 24
    x = jax.random.normal(kx, (B, N, F), dtype=jnp.float32)
    adj = (jax.random.uniform(ka, (B, N, N)) > 0.5).astype(jnp.float32)
    stdv = math.sqrt(6.0 / (F + C))
    weight = jax.random.uniform(kw, (F, C), minval=-stdv, maxval=stdv,
                                dtype=jnp.float32)
    bias = jax.random.uniform(kb, (C,), minval=-0.1, maxval=0.1, dtype=jnp.float32)
    mask = (jax.random.uniform(km, (B, N)) > 0.3).astype(jnp.float32)

    def check(out, ref, rtol, atol, name):
        o = np.asarray(jnp.asarray(out, dtype=jnp.float32))
        r = np.asarray(jnp.asarray(ref, dtype=jnp.float32))
        np.testing.assert_allclose(o, r, rtol=rtol, atol=atol, err_msg=name)

    # 1) per-graph adjacency, self-loops, bias; bf16 adjacency storage is
    #    lossless for a {0,1} adjacency, so the f32 tolerance stays tight.
    out1 = jax.block_until_ready(
        node_network_dense(x, adj, weight, bias, adj_bf16=True))
    ref1 = _reference(x, adj, weight, bias)
    check(out1, ref1, 1e-4, 1e-5, "case1 per-graph adj")

    # 2) shared adjacency (B_adj=1) + mask + improved self-loops -> concat path
    adj_sh = (jax.random.uniform(ka2, (1, N, N)) > 0.5).astype(jnp.float32)
    out2 = jax.block_until_ready(
        node_network_dense(x, adj_sh, weight, bias, mask=mask, improved=True))
    ref2 = _reference(x, adj_sh, weight, bias, mask=mask, improved=True)
    check(out2, ref2, 1e-4, 1e-5, "case2 shared adj")

    # 3) add_loop=False, no bias
    out3 = jax.block_until_ready(
        node_network_dense(x, adj, weight, None, add_loop=False))
    ref3 = _reference(x, adj, weight, None, add_loop=False)
    check(out3, ref3, 1e-4, 1e-5, "case3 no loops / no bias")

    # 4) bf16 inputs -> full bf16 MXU path (looser tolerance by design)
    out4 = jax.block_until_ready(
        node_network_dense(x.astype(jnp.bfloat16), adj,
                           weight.astype(jnp.bfloat16), bias, mask=mask))
    ref4 = _reference(x, adj, weight, bias, mask=mask)
    check(out4, ref4, 3e-2, 3e-2, "case4 bf16")

    # 5) larger graph exercising the row- and K-tiled accumulator path
    N2 = 700
    x5 = jax.random.normal(kx2, (B, N2, F), dtype=jnp.float32)
    adj5 = (jax.random.uniform(ka, (B, N2, N2)) > 0.9).astype(jnp.float32)
    mask5 = (jax.random.uniform(km, (B, N2)) > 0.3).astype(jnp.float32)
    out5 = jax.block_until_ready(
        node_network_dense(x5, adj5, weight, bias, mask=mask5, adj_bf16=True))
    ref5 = _reference(x5, adj5, weight, bias, mask=mask5)
    check(out5, ref5, 1e-3, 1e-4, "case5 tiled")

    print("KERNEL_OK")
</pallas_src>

<mosaic_0001>
module attributes {stable_mosaic.version = 11 : i64} {
  func.func @_spmm_kernel(%arg0: i32, %arg1: i32, %arg2: i32, %arg3: memref<1x8x1xf32, #tpu.memory_space<vmem>>, %arg4: memref<1x8x8xbf16, #tpu.memory_space<vmem>>, %arg5: memref<1x8x128xf32, #tpu.memory_space<vmem>>, %arg6: memref<1x128xf32, #tpu.memory_space<vmem>>, %arg7: memref<1x8x128xf32, #tpu.memory_space<vmem>>, %arg8: memref<8x128xf32, #tpu.memory_space<vmem>>) attributes {dimension_semantics = [#tpu.dimension_semantics<parallel>, #tpu.dimension_semantics<parallel>, #tpu.dimension_semantics<arbitrary>], iteration_bounds = array<i64: 2, 1, 1>, scalar_prefetch = 0 : i64, scratch_operands = 1 : i64, tpu.core_type = #tpu.core_type<tc>, window_params = [{transform_indices = @transform_0, window_bounds = array<i64: 1, 8, 1>}, {transform_indices = @transform_1, window_bounds = array<i64: 1, 8, 8>}, {transform_indices = @transform_2, window_bounds = array<i64: 1, 8, 128>}, {pipeline_mode = #tpu.pipeline_mode<synchronous>, transform_indices = @transform_3, window_bounds = array<i64: 1, 128>}, {transform_indices = @transform_4, window_bounds = array<i64: 1, 8, 128>}]} {
    %c0_i32 = arith.constant 0 : i32
    %0 = arith.cmpi eq, %arg2, %c0_i32 : i32
    %1 = arith.extui %0 : i1 to i32
    %c0_i32_0 = arith.constant 0 : i32
    %2 = arith.cmpi ne, %1, %c0_i32_0 : i32
    scf.if %2 {
      %cst_12 = arith.constant 0.000000e+00 : f32
      %15 = vector.broadcast %cst_12 : f32 to vector<8x128xf32>
      %c0_13 = arith.constant 0 : index
      %c0_14 = arith.constant 0 : index
      %16 = vector.load %arg8[%c0_13, %c0_14] : memref<8x128xf32, #tpu.memory_space<vmem>>, vector<8x128xf32>
      tpu.vector_store %arg8[%c0_13, %c0_14], %15 {strides = array<i32>} : memref<8x128xf32, #tpu.memory_space<vmem>>, vector<8x128xf32>,
    } else {
    }
    %c0 = arith.constant 0 : index
    %c0_1 = arith.constant 0 : index
    %c0_2 = arith.constant 0 : index
    %3 = vector.load %arg4[%c0, %c0_1, %c0_2] : memref<1x8x8xbf16, #tpu.memory_space<vmem>>, vector<1x8x8xbf16>
    %4 = vector.shape_cast %3 : vector<1x8x8xbf16> to vector<8x8xbf16>
    %5 = arith.extf %4 : vector<8x8xbf16> to vector<8x8xf32>
    %c0_3 = arith.constant 0 : index
    %c0_4 = arith.constant 0 : index
    %6 = vector.load %arg8[%c0_3, %c0_4] : memref<8x128xf32, #tpu.memory_space<vmem>>, vector<8x128xf32>
    %c0_5 = arith.constant 0 : index
    %c0_6 = arith.constant 0 : index
    %c0_7 = arith.constant 0 : index
    %7 = vector.load %arg5[%c0_5, %c0_6, %c0_7] : memref<1x8x128xf32, #tpu.memory_space<vmem>>, vector<1x8x128xf32>
    %8 = vector.shape_cast %7 : vector<1x8x128xf32> to vector<8x128xf32>
    %cst = arith.constant dense<0.000000e+00> : vector<8x128xf32>
    %9 = tpu.matmul %5, %8, %cst {dimension_numbers = #tpu.dot_dimension_numbers<[1], [0], [0], [1], [0, 0, 1, 1], [], []>} : vector<8x8xf32>, vector<8x128xf32>, vector<8x128xf32> -> vector<8x128xf32>
    %10 = arith.addf %6, %9 : vector<8x128xf32>
    %c0_8 = arith.constant 0 : index
    %c0_9 = arith.constant 0 : index
    %11 = vector.load %arg8[%c0_8, %c0_9] : memref<8x128xf32, #tpu.memory_space<vmem>>, vector<8x128xf32>
    tpu.vector_store %arg8[%c0_8, %c0_9], %10 {strides = array<i32>} : memref<8x128xf32, #tpu.memory_space<vmem>>, vector<8x128xf32>,
    %c0_i32_10 = arith.constant 0 : i32
    %12 = arith.cmpi eq, %arg2, %c0_i32_10 : i32
    %13 = arith.extui %12 : i1 to i32
    %c0_i32_11 = arith.constant 0 : i32
    %14 = arith.cmpi ne, %13, %c0_i32_11 : i32
    scf.if %14 {
      %c0_12 = arith.constant 0 : index
      %c0_13 = arith.constant 0 : index
      %c0_14 = arith.constant 0 : index
      %15 = vector.load %arg3[%c0_12, %c0_13, %c0_14] : memref<1x8x1xf32, #tpu.memory_space<vmem>>, vector<1x8x1xf32>
      %16 = vector.shape_cast %15 : vector<1x8x1xf32> to vector<8x1xf32>
      %c0_15 = arith.constant 0 : index
      %c0_16 = arith.constant 0 : index
      %17 = vector.load %arg8[%c0_15, %c0_16] : memref<8x128xf32, #tpu.memory_space<vmem>>, vector<8x128xf32>
      %18 = vector.broadcast %16 : vector<8x1xf32> to vector<8x128xf32>
      %19 = arith.mulf %18, %17 : vector<8x128xf32>
      %c0_17 = arith.constant 0 : index
      %c0_18 = arith.constant 0 : index
      %20 = vector.load %arg6[%c0_17, %c0_18] : memref<1x128xf32, #tpu.memory_space<vmem>>, vector<1x128xf32>
      %21 = vector.broadcast %20 : vector<1x128xf32> to vector<8x128xf32>
      %22 = arith.addf %19, %21 : vector<8x128xf32>
      %c0_19 = arith.constant 0 : index
      %c0_20 = arith.constant 0 : index
      %c0_21 = arith.constant 0 : index
      %23 = vector.load %arg7[%c0_19, %c0_20, %c0_21] : memref<1x8x128xf32, #tpu.memory_space<vmem>>, vector<1x8x128xf32>
      %24 = vector.shape_cast %23 : vector<1x8x128xf32> to vector<8x128xf32>
      %25 = vector.shape_cast %22 : vector<8x128xf32> to vector<1x8x128xf32>
      tpu.vector_store %arg7[%c0_19, %c0_20, %c0_21], %25 {strides = array<i32>} : memref<1x8x128xf32, #tpu.memory_space<vmem>>, vector<1x8x128xf32>,
    } else {
    }
    return
  }
  func.func @transform_0(%arg0: i32, %arg1: i32, %arg2: i32) -> (i32, i32, i32) {
    %c0_i32 = arith.constant 0 : i32
    %c0_i32_0 = arith.constant 0 : i32
    return %arg0, %arg1, %c0_i32 : i32, i32, i32
  }
  func.func @transform_1(%arg0: i32, %arg1: i32, %arg2: i32) -> (i32, i32, i32) {
    %c0_i32 = arith.constant 0 : i32
    return %arg0, %arg1, %arg2 : i32, i32, i32
  }
  func.func @transform_2(%arg0: i32, %arg1: i32, %arg2: i32) -> (i32, i32, i32) {
    %c0_i32 = arith.constant 0 : i32
    %c0_i32_0 = arith.constant 0 : i32
    return %arg0, %arg2, %c0_i32 : i32, i32, i32
  }
  func.func @transform_3(%arg0: i32, %arg1: i32, %arg2: i32) -> (i32, i32) {
    %c0_i32 = arith.constant 0 : i32
    %c0_i32_0 = arith.constant 0 : i32
    %c0_i32_1 = arith.constant 0 : i32
    return %c0_i32, %c0_i32_0 : i32, i32
  }
  func.func @transform_4(%arg0: i32, %arg1: i32, %arg2: i32) -> (i32, i32, i32) {
    %c0_i32 = arith.constant 0 : i32
    %c0_i32_0 = arith.constant 0 : i32
    return %arg0, %arg1, %c0_i32 : i32, i32, i32
  }
}

</mosaic_0001>

<llo_original>
// kernel: tpu_custom_call.1
$region0: #{tpu_custom_call.1}
  #allocation0 [shape = 'u32[]', space=smem, size = 0x4, offset = 0x4, fixed_abs, tag = 'smem constant byte address 0x4 - core index']
  #allocation1 [shape = 'u32[144,128]{1,0:T(1,128)}', space=vmem, size = 0x12000, scoped, tag = 'internal scratch']
  #allocation2 [shape = 'f32[8,128]{1,0:T(8,128)}', space=vmem, size = 0x1000, scoped, tag = 'scratch operand']
  %s0 = inlined_call_operand.vmem [shape: f32[2,8,1], index: 0, kind: input, shape index: {}]
  %s1 = inlined_call_operand.hbm [shape: bf16[2,8,8], index: 1, kind: input, shape index: {}]
  %s2 = inlined_call_operand.vmem [shape: f32[2,8,128], index: 2, kind: input, shape index: {}]
  %s3 = inlined_call_operand.vmem [shape: f32[1,128], index: 3, kind: input, shape index: {}]
  %s4 = inlined_call_operand.hbm [shape: f32[2,8,128], index: 4, kind: output, shape index: {}]
  %s5 = sld [smem:[#allocation0]]
  $region61: #{tpu_custom_call.1} parent=0
    _
  %s7 = ssub.s32 1, %s5
  %s8 = scalar_select 0, %s7, %s5
  $region1: #{tpu_custom_call.1} parent=0
    #allocation3 [shape = 'u8[4096]{0}', space=vmem, size = 0x1000, scoped, tag = 'input window, operand 1']
    #allocation4 [shape = 's32[2]{0}', space=sflag, size = 0x8, scoped, tag = 'scoped memory for tpu_custom_call.1']
    #allocation5 [shape = 's32[2]{0}', space=sflag, size = 0x8, scoped, tag = 'scoped memory for tpu_custom_call.1']
    #allocation6 [shape = 'u8[8192]{0}', space=vmem, size = 0x2000, scoped, tag = 'output window, operand 0']
    %9 = vsyncpa [#allocation4], 0
    %s10 = scalar_lea.sflag [#allocation4], 1
    %11 = vsyncpa %s10, 0
    %12 = vsyncpa [#allocation5], 0
    %s13 = scalar_lea.sflag [#allocation5], 1
    %14 = vsyncpa %s13, 0
    loop: start=0, step=1, limit=4
    $region2: #{tpu_custom_call.1} parent=1 // loop_pre_header
      _
    $region3: #{tpu_custom_call.1} parent=1 // loop_header
      %s16 = sphi 0, %s20
      %p17 = scmp.ge.s32.totalorder %s16, 4
      %s23 = sphi 0, %s42
      %s24 = sphi 0, %s38
      %s25 = sphi 0, %s34
      %s26 = sphi 0, %s23
      %s27 = sphi 0, %s24
      %s28 = sphi 0, %s25
      %s29 = sphi 0, %s26
      %s30 = sphi 0, %s27
      %s31 = sphi 0, %s28
      %s47 = sphi 0, %s49
      %s50 = sphi 0, %s47
      %s51 = sphi 0, %s50
      %s67 = sphi 0, %s51
      %s77 = sphi 0, %s79
      %s80 = sphi 0, %s77
      %s81 = sphi 0, %s80
      %s97 = sphi 0, %s81
      %s105 = sphi 0, %s107
      %s108 = sphi 0, %s105
      %s109 = sphi 0, %s108
      %s125 = sphi 0, %s109
      %s129 = sphi 0, %s129
      %s131 = sphi 0, %s129
      %s132 = sphi 0, %s131
      %s146 = sphi 0, %s132
      %s154 = sphi 0, %s156
      %s157 = sphi 0, %s154
      %s158 = sphi 0, %s157
      %s174 = sphi 0, %s158
    $region4: #{tpu_custom_call.1} parent=1 // loop_header_branch
      %19 = sbr.rel (%p17) target = $region8
    $region5: #{tpu_custom_call.1} parent=1 // loop_body
      %s21 = ssub.s32 %s16, 1
      %s22 = ssub.s32 %s16, 2
      %s32 = sadd.s32 1, %s25
      %p33 = scmp.ge.s32.totalorder %s32, 1
      %s34 = scalar_select %p33, 0, %s32
      %s35 = sadd.s32 1, %s24
      %s36 = scalar_select %p33, %s35, %s24
      %p37 = scmp.ge.s32.totalorder %s36, 1
      %s38 = scalar_select %p37, 0, %s36
      %s39 = sadd.s32 1, %s23
      %s40 = scalar_select %p37, %s39, %s23
      %p41 = scmp.ge.s32.totalorder %s40, 2
      %s42 = scalar_select %p41, 0, %s40
      %s43 = ssub.s32 %s23, %s42
      %s44 = ssub.s32 %s24, %s38
      %s45 = sor.u32 %s43, %s44
      %p46 = scmp.eq.s32.totalorder %s45, 0
      %s48 = sadd.s32 %s47, 1
      %s49 = scalar_select %p46, %s47, %s48
      %p52 = pneg %p46
      %p53 = scmp.eq.s32.totalorder %s16, 1
      %p54 = por %p52, %p53
      %p55 = scmp.ne.s32.totalorder %s47, %s50
      %p56 = scmp.eq.s32.totalorder %s16, 0
      %p57 = por %p55, %p56
      %p58 = scmp.ne.s32.totalorder %s47, %s50
      %p59 = scmp.eq.s32.totalorder %s21, 1
      %p60 = por %p58, %p59
      %p61 = scmp.ne.s32.totalorder %s50, %s51
      %p62 = scmp.eq.s32.totalorder %s21, 0
      %p63 = por %p61, %p62
      %p64 = scmp.ne.s32.totalorder %s50, %s51
      %p65 = scmp.eq.s32.totalorder %s22, 1
      %p66 = por %p64, %p65
      %p68 = scmp.ne.s32.totalorder %s51, %s67
      %p69 = scmp.eq.s32.totalorder %s22, 0
      %p70 = por %p68, %p69
      %s71 = ssub.s32 %s23, %s42
      %s72 = ssub.s32 %s24, %s38
      %s73 = sor.u32 %s71, %s72
      %s74 = ssub.s32 %s25, %s34
      %s75 = sor.u32 %s73, %s74
      %p76 = scmp.eq.s32.totalorder %s75, 0
      %s78 = sadd.s32 %s77, 1
      %s79 = scalar_select %p76, %s77, %s78
      %p82 = pneg %p76
      %p83 = scmp.eq.s32.totalorder %s16, 1
      %p84 = por %p82, %p83
      %p85 = scmp.ne.s32.totalorder %s77, %s80
      %p86 = scmp.eq.s32.totalorder %s16, 0
      %p87 = por %p85, %p86
      %p88 = scmp.ne.s32.totalorder %s77, %s80
      %p89 = scmp.eq.s32.totalorder %s21, 1
      %p90 = por %p88, %p89
      %p91 = scmp.ne.s32.totalorder %s80, %s81
      %p92 = scmp.eq.s32.totalorder %s21, 0
      %p93 = por %p91, %p92
      %p94 = scmp.ne.s32.totalorder %s80, %s81
      %p95 = scmp.eq.s32.totalorder %s22, 1
      %p96 = por %p94, %p95
      %p98 = scmp.ne.s32.totalorder %s81, %s97
      %p99 = scmp.eq.s32.totalorder %s22, 0
      %p100 = por %p98, %p99
      %s101 = ssub.s32 %s23, %s42
      %s102 = ssub.s32 %s25, %s34
      %s103 = sor.u32 %s101, %s102
      %p104 = scmp.eq.s32.totalorder %s103, 0
      %s106 = sadd.s32 %s105, 1
      %s107 = scalar_select %p104, %s105, %s106
      %p110 = pneg %p104
      %p111 = scmp.eq.s32.totalorder %s16, 1
      %p112 = por %p110, %p111
      %p113 = scmp.ne.s32.totalorder %s105, %s108
      %p114 = scmp.eq.s32.totalorder %s16, 0
      %p115 = por %p113, %p114
      %p116 = scmp.ne.s32.totalorder %s105, %s108
      %p117 = scmp.eq.s32.totalorder %s21, 1
      %p118 = por %p116, %p117
      %p119 = scmp.ne.s32.totalorder %s108, %s109
      %p120 = scmp.eq.s32.totalorder %s21, 0
      %p121 = por %p119, %p120
      %p122 = scmp.ne.s32.totalorder %s108, %s109
      %p123 = scmp.eq.s32.totalorder %s22, 1
      %p124 = por %p122, %p123
      %p126 = scmp.ne.s32.totalorder %s109, %s125
      %p127 = scmp.eq.s32.totalorder %s22, 0
      %p128 = por %p126, %p127
      %s130 = sadd.s32 %s129, 1
      %p133 = scmp.eq.s32.totalorder %s16, 1
      %p134 = scmp.ne.s32.totalorder %s129, %s131
      %p135 = scmp.eq.s32.totalorder %s16, 0
      %p136 = por %p134, %p135
      %p137 = scmp.ne.s32.totalorder %s129, %s131
      %p138 = scmp.eq.s32.totalorder %s21, 1
      %p139 = por %p137, %p138
      %p140 = scmp.ne.s32.totalorder %s131, %s132
      %p141 = scmp.eq.s32.totalorder %s21, 0
      %p142 = por %p140, %p141
      %p143 = scmp.ne.s32.totalorder %s131, %s132
      %p144 = scmp.eq.s32.totalorder %s22, 1
      %p145 = por %p143, %p144
      %p147 = scmp.ne.s32.totalorder %s132, %s146
      %p148 = scmp.eq.s32.totalorder %s22, 0
      %p149 = por %p147, %p148
      %s150 = ssub.s32 %s23, %s42
      %s151 = ssub.s32 %s24, %s38
      %s152 = sor.u32 %s150, %s151
      %p153 = scmp.eq.s32.totalorder %s152, 0
      %s155 = sadd.s32 %s154, 1
      %s156 = scalar_select %p153, %s154, %s155
      %p159 = pneg %p153
      %p160 = scmp.eq.s32.totalorder %s16, 1
      %p161 = por %p159, %p160
      %p162 = scmp.ne.s32.totalorder %s154, %s157
      %p163 = scmp.eq.s32.totalorder %s16, 0
      %p164 = por %p162, %p163
      %p165 = scmp.ne.s32.totalorder %s154, %s157
      %p166 = scmp.eq.s32.totalorder %s21, 1
      %p167 = por %p165, %p166
      %p168 = scmp.ne.s32.totalorder %s157, %s158
      %p169 = scmp.eq.s32.totalorder %s21, 0
      %p170 = por %p168, %p169
      %p171 = scmp.ne.s32.totalorder %s157, %s158
      %p172 = scmp.eq.s32.totalorder %s22, 1
      %p173 = por %p171, %p172
      %p175 = scmp.ne.s32.totalorder %s158, %s174
      %p176 = scmp.eq.s32.totalorder %s22, 0
      %p177 = por %p175, %p176
      %p178 = scmp.le.s32.totalorder 1, %s16
      %p179 = scmp.lt.s32.totalorder %s16, 3
      %p180 = pnand %p178, %p179
      %p181 = pneg %p180
      // Predicated region
      $region9: #{tpu_custom_call.1} parent=5 // pred_check
        _
      $region10: #{tpu_custom_call.1} parent=5 // pred_check_branch
        %183 = sbr.rel (%p180) target = $region12
      $region11: #{tpu_custom_call.1} parent=5 // pred_region
        %s184 = ssub.s32 %s16, 1
        // Predicated region
        $region13: #{tpu_custom_call.1} parent=11 // pred_check
          %p185 = pneg %p142
        $region14: #{tpu_custom_call.1} parent=11 // pred_check_branch
          %187 = sbr.rel (%p185) target = $region16
        $region15: #{tpu_custom_call.1} parent=11 // pred_region
          _
        $region16: #{tpu_custom_call.1} parent=11 // pred_fallthru
          _
      $region12: #{tpu_custom_call.1} parent=5 // pred_fallthru
        _
      %p188 = scmp.lt.s32.totalorder %s16, 2
      // Predicated region
      $region17: #{tpu_custom_call.1} parent=5 // pred_check
        %p189 = pneg %p188
      $region18: #{tpu_custom_call.1} parent=5 // pred_check_branch
        %191 = sbr.rel (%p189) target = $region20
      $region19: #{tpu_custom_call.1} parent=5 // pred_region
        // Predicated region
        $region21: #{tpu_custom_call.1} parent=19 // pred_check
          %p192 = pneg %p57
        $region22: #{tpu_custom_call.1} parent=19 // pred_check_branch
          %194 = sbr.rel (%p192) target = $region24
        $region23: #{tpu_custom_call.1} parent=19 // pred_region
          %p195 = scmp.lt.s32.totalorder %s23, 1
          %s196 = scalar_select %p195, %s23, 1
          %p197 = scmp.lt.s32.totalorder %s24, 0
          %s198 = scalar_select %p197, %s24, 0
          %s199 = sadd.s32 %s198, %s196
          %s200 = smul.addr %s199, 8
          %s201 = scalar_lea.vmem %s0, %s200
        $region24: #{tpu_custom_call.1} parent=19 // pred_fallthru
          _
        // Predicated region
        $region25: #{tpu_custom_call.1} parent=19 // pred_check
          %p202 = pneg %p87
        $region26: #{tpu_custom_call.1} parent=19 // pred_check_branch
          %204 = sbr.rel (%p202) target = $region28
        $region27: #{tpu_custom_call.1} parent=19 // pred_region
          %s205 = sand.u32 %s77, 1
          %s206 = scalar_lea.sflag [#allocation4], %s205
          %s207 = sand.u32 %s77, 1
          %s208 = smul.addr %s207, 4
          %s209 = scalar_lea.vmem [#allocation3], %s208
          %s211 = ssub.s32 64, 64
          %212 = vsyncadd %s206, %s211
          %s213 = sadd.s32 %s25, %s24
          %s214 = sadd.s32 %s213, %s23
          %s215 = smul.addr %s214, 64
          %s216 = scalar_lea.hbm %s1, %s215
          %s218 = sshll.u32 %s209, 4
          %s219 = int_to_ptr.vmem [resolvable:$true] %s218
          %221 = dma.hbm_to_vmem [thread:$0]  %s216, 64, %s219, %s206
        $region28: #{tpu_custom_call.1} parent=19 // pred_fallthru
          _
        // Predicated region
        $region29: #{tpu_custom_call.1} parent=19 // pred_check
          %p222 = pneg %p115
        $region30: #{tpu_custom_call.1} parent=19 // pred_check_branch
          %224 = sbr.rel (%p222) target = $region32
        $region31: #{tpu_custom_call.1} parent=19 // pred_region
          %p225 = scmp.lt.s32.totalorder %s23, 1
          %s226 = scalar_select %p225, %s23, 1
          %p227 = scmp.lt.s32.totalorder %s25, 0
          %s228 = scalar_select %p227, %s25, 0
          %s229 = sadd.s32 %s228, %s226
          %s230 = smul.addr %s229, 8
          %s231 = scalar_lea.vmem %s2, %s230
        $region32: #{tpu_custom_call.1} parent=19 // pred_fallthru
          _
      $region20: #{tpu_custom_call.1} parent=5 // pred_fallthru
        _
      %p232 = scmp.le.s32.totalorder 1, %s16
      %p233 = scmp.lt.s32.totalorder %s16, 3
      %p234 = pnand %p232, %p233
      %p235 = pneg %p234
      // Predicated region
      $region33: #{tpu_custom_call.1} parent=5 // pred_check
        _
      $region34: #{tpu_custom_call.1} parent=5 // pred_check_branch
        %237 = sbr.rel (%p234) target = $region36
      $region35: #{tpu_custom_call.1} parent=5 // pred_region
        %s238 = ssub.s32 %s16, 1
        %s239 = sand.u32 %s80, 1
        %s240 = scalar_lea.sflag [#allocation4], %s239
        %s241 = sand.u32 %s80, 1
        %s242 = smul.addr %s241, 4
        %s243 = scalar_lea.vmem [#allocation3], %s242
        // Predicated region
        $region37: #{tpu_custom_call.1} parent=35 // pred_check
          %p244 = pneg %p93
        $region38: #{tpu_custom_call.1} parent=35 // pred_check_branch
          %246 = sbr.rel (%p244) target = $region40
        $region39: #{tpu_custom_call.1} parent=35 // pred_region
          %247 = dma.done %s240, 64
        $region40: #{tpu_custom_call.1} parent=35 // pred_fallthru
          _
        %p248 = scmp.lt.s32.totalorder %s26, 1
        %s249 = scalar_select %p248, %s26, 1
        %p250 = scmp.lt.s32.totalorder %s27, 0
        %s251 = scalar_select %p250, %s27, 0
        %s252 = sadd.s32 %s251, %s249
        %s253 = smul.addr %s252, 8
        %s254 = scalar_lea.vmem %s0, %s253
        %p255 = pneg %p63
        %p256 = pneg %p60
        %s257 = sand.u32 %s80, 1
        %s258 = scalar_lea.sflag [#allocation4], %s257
        %s259 = sand.u32 %s80, 1
        %s260 = smul.addr %s259, 4
        %s261 = scalar_lea.vmem [#allocation3], %s260
        %p262 = pneg %p93
        %p263 = pneg %p90
        %p264 = scmp.lt.s32.totalorder %s26, 1
        %s265 = scalar_select %p264, %s26, 1
        %p266 = scmp.lt.s32.totalorder %s28, 0
        %s267 = scalar_select %p266, %s28, 0
        %s268 = sadd.s32 %s267, %s265
        %s269 = smul.addr %s268, 8
        %s270 = scalar_lea.vmem %s2, %s269
        %p271 = pneg %p121
        %p272 = pneg %p118
        %p273 = pneg %p142
        %p274 = pneg %p139
        %p275 = pneg %p170
        %p276 = pneg %p167
        %s277 = sand.u32 %s157, 1
        %s278 = scalar_lea.sflag [#allocation5], %s277
        %s279 = sand.u32 %s157, 1
        %s280 = smul.addr %s279, 8
        %s281 = scalar_lea.vmem [#allocation6], %s280
        %p282 = scmp.lt.s32.totalorder %s26, 1
        %s283 = scalar_select %p282, %s26, 1
        %p284 = scmp.lt.s32.totalorder %s27, 0
        %s285 = scalar_select %p284, %s27, 0
        %s286 = sadd.s32 %s285, %s283
        %s287 = smul.addr %s286, 8
        %s288 = scalar_lea.vmem %s0, %s287
        %p289 = scmp.lt.s32.totalorder %s26, 1
        %s290 = scalar_select %p289, %s26, 1
        %p291 = scmp.lt.s32.totalorder %s28, 0
        %s292 = scalar_select %p291, %s28, 0
        %s293 = sadd.s32 %s292, %s290
        %s294 = smul.addr %s293, 8
        %s295 = scalar_lea.vmem %s2, %s294
        %p296 = scmp.eq.s32.totalorder %s28, 0
        // Predicated region
        $region41: #{tpu_custom_call.1} parent=35 // pred_check
          %p297 = pneg %p296
        $region42: #{tpu_custom_call.1} parent=35 // pred_check_branch
          %299 = sbr.rel (%p297) target = $region44
        $region43: #{tpu_custom_call.1} parent=35 // pred_region
          %300 = vst [vmem:[#allocation2] sm:$0xff] 0.0
        $region44: #{tpu_custom_call.1} parent=35 // pred_fallthru
          _
        %v301 = vld [vmem:[%s243] sm:$0xf]
        %v302 = vunpack.c.l.bf16 %v301
        %v303 = vld [vmem:[#allocation2] sm:$0xff]
        %v304 = vld [vmem:[%s295] sm:$0xff]
        %vm305 = vcmask 64512
        %v307 = vsel %vm305, %v302, 0
        %309 = vmatprep.subr.mxu0 0.0
        %310 = vmatpush1.msra.mxu0 0.0
        %311 = vmatprep.subr.mxu0 0.0
        %312 = vmatpush1.msra.mxu0 0.0
        %313 = vmatprep.subr.mxu0 0.0
        %314 = vmatpush1.msra.mxu0 0.0
        %315 = vmatprep.subr.mxu0 0.0
        %316 = vmatpush1.msra.mxu0 0.0
        %317 = vmatprep.subr.mxu0 0.0
        %318 = vmatpush1.msra.mxu0 0.0
        %319 = vmatprep.subr.mxu0 0.0
        %320 = vmatpush1.msra.mxu0 0.0
        %321 = vmatprep.subr.mxu0 0.0
        %322 = vmatpush1.msra.mxu0 0.0
        %323 = vmatprep.subr.mxu0 0.0
        %324 = vmatpush1.msra.mxu0 0.0
        %325 = vmatprep.subr.mxu0 0.0
        %326 = vmatpush1.msra.mxu0 0.0
        %327 = vmatprep.subr.mxu0 0.0
        %328 = vmatpush1.msra.mxu0 0.0
        %329 = vmatprep.subr.mxu0 0.0
        %330 = vmatpush1.msra.mxu0 0.0
        %331 = vmatprep.subr.mxu0 0.0
        %332 = vmatpush1.msra.mxu0 0.0
        %333 = vmatprep.subr.mxu0 0.0
        %334 = vmatpush1.msra.mxu0 0.0
        %335 = vmatprep.subr.mxu0 0.0
        %336 = vmatpush1.msra.mxu0 0.0
        %337 = vmatprep.subr.mxu0 0.0
        %338 = vmatpush1.msra.mxu0 0.0
        %339 = vmatprep.subr.mxu0 0.0
        %340 = vmatpush1.msra.mxu0 %v304
        %341 = vmatprep.subr.mxu0 0.0
        %342 = vmatpush2.msra.mxu0 0.0
        %343 = vmatprep.subr.mxu0 0.0
        %344 = vmatpush2.msra.mxu0 0.0
        %345 = vmatprep.subr.mxu0 0.0
        %346 = vmatpush2.msra.mxu0 0.0
        %347 = vmatprep.subr.mxu0 0.0
        %348 = vmatpush2.msra.mxu0 0.0
        %349 = vmatprep.subr.mxu0 0.0
        %350 = vmatpush2.msra.mxu0 0.0
        %351 = vmatprep.subr.mxu0 0.0
        %352 = vmatpush2.msra.mxu0 0.0
        %353 = vmatprep.subr.mxu0 0.0
        %354 = vmatpush2.msra.mxu0 0.0
        %355 = vmatprep.subr.mxu0 0.0
        %356 = vmatpush2.msra.mxu0 0.0
        %357 = vmatprep.subr.mxu0 0.0
        %358 = vmatpush2.msra.mxu0 0.0
        %359 = vmatprep.subr.mxu0 0.0
        %360 = vmatpush2.msra.mxu0 0.0
        %361 = vmatprep.subr.mxu0 0.0
        %362 = vmatpush2.msra.mxu0 0.0
        %363 = vmatprep.subr.mxu0 0.0
        %364 = vmatpush2.msra.mxu0 0.0
        %365 = vmatprep.subr.mxu0 0.0
        %366 = vmatpush2.msra.mxu0 0.0
        %367 = vmatprep.subr.mxu0 0.0
        %368 = vmatpush2.msra.mxu0 0.0
        %369 = vmatprep.subr.mxu0 0.0
        %370 = vmatpush2.msra.mxu0 0.0
        %371 = vmatprep.subr.mxu0 0.0
        %372 = vmatpush2.msra.mxu0 0.0
        %373 = vmatprep.mubr.f32.mxu0 0.0
        %374 = vmatmul.mubr.f32.gmra.mxu0 %v307
        %v375 = vpop.f32.mrf.mxu0
        %v376 = vadd.f32 0.0, %v375
        %v377 = vpop.f32.mrf.mxu0
        %378 = vdwg.mxu0
        %v379 = vadd.f32 %v303, %v376
        %380 = vst [vmem:[#allocation2] sm:$0xff] %v379
        // Predicated region
        $region45: #{tpu_custom_call.1} parent=35 // pred_check
          %p381 = pneg %p296
        $region46: #{tpu_custom_call.1} parent=35 // pred_check_branch
          %383 = sbr.rel (%p381) target = $region48
        $region47: #{tpu_custom_call.1} parent=35 // pred_region
          %v384 = vld [vmem:[%s288] sm:$0xff]
          %v385 = vld [vmem:[#allocation2] sm:$0xff]
          %387 = vset.pattern.permute.xlu0 0
          %388 = vperm.xlu0 %387, %v384
          %v389 = vpop.permute.xlu0 %388
          %v391 = vmul.f32 %v389, %v385
          %v392 = vld [vmem:[%s3] sm:$0x1]
          %v394 = vlaneseq
          %v395 = vshrl.u32 %v394, 7
          %v396 = vsub.s32 0, %v395
          %v397 = vrot.slane %v392, %v396
          %v399 = vadd.f32 %v391, %v397
          %400 = vst [vmem:[%s281] sm:$0xff] %v399
        $region48: #{tpu_custom_call.1} parent=35 // pred_fallthru
          _
        %s401 = sand.u32 %s157, 1
        %s402 = scalar_lea.sflag [#allocation5], %s401
        %s403 = sand.u32 %s157, 1
        %s404 = smul.addr %s403, 8
        %s405 = scalar_lea.vmem [#allocation6], %s404
        // Predicated region
        $region49: #{tpu_custom_call.1} parent=35 // pred_check
          %p406 = pneg %p167
        $region50: #{tpu_custom_call.1} parent=35 // pred_check_branch
          %408 = sbr.rel (%p406) target = $region52
        $region51: #{tpu_custom_call.1} parent=35 // pred_region
          %s410 = ssub.s32 128, 128
          %411 = vsyncadd %s402, %s410
          %s412 = sadd.s32 %s27, %s26
          %s413 = smul.addr %s412, 128
          %s414 = scalar_lea.hbm %s4, %s413
          %s416 = sshll.u32 %s405, 4
          %s417 = int_to_ptr.vmem [resolvable:$true] %s416
          %419 = dma.vmem_to_hbm [thread:$0]  %s417, 128, %s414, %s402
        $region52: #{tpu_custom_call.1} parent=35 // pred_fallthru
          _
      $region36: #{tpu_custom_call.1} parent=5 // pred_fallthru
        _
      %p420 = scmp.le.s32.totalorder 2, %s16
      // Predicated region
      $region53: #{tpu_custom_call.1} parent=5 // pred_check
        %p421 = pneg %p420
      $region54: #{tpu_custom_call.1} parent=5 // pred_check_branch
        %423 = sbr.rel (%p421) target = $region56
      $region55: #{tpu_custom_call.1} parent=5 // pred_region
        %s424 = ssub.s32 %s16, 2
        // Predicated region
        $region57: #{tpu_custom_call.1} parent=55 // pred_check
          %p425 = pneg %p173
        $region58: #{tpu_custom_call.1} parent=55 // pred_check_branch
          %427 = sbr.rel (%p425) target = $region60
        $region59: #{tpu_custom_call.1} parent=55 // pred_region
          %s428 = sand.u32 %s158, 1
          %s429 = scalar_lea.sflag [#allocation5], %s428
          %s430 = sand.u32 %s158, 1
          %s431 = smul.addr %s430, 8
          %s432 = scalar_lea.vmem [#allocation6], %s431
          %433 = dma.done %s429, 128
        $region60: #{tpu_custom_call.1} parent=55 // pred_fallthru
          _
      $region56: #{tpu_custom_call.1} parent=5 // pred_fallthru
        _
    $region6: #{tpu_custom_call.1} parent=1 // loop_footer
      %s20 = sadd.s32 1, %s16
    $region7: #{tpu_custom_call.1} parent=1 // loop_footer_branch
      %15 = sbr.rel target = $region3
    $region8: #{tpu_custom_call.1} parent=1 // loop_exit
      _
    %434 = vsyncpa [#allocation4], 1
    %s435 = scalar_lea.sflag [#allocation4], 1
    %436 = vsyncpa %s435, 1
    %437 = vsyncpa [#allocation5], 1
    %s438 = scalar_lea.sflag [#allocation5], 1
    %439 = vsyncpa %s438, 1

</llo_original>
